<compile_context>
chip_gen: v5e
topology: v5e:2x2
jax: 0.10.0
libtpu: 0.0.40
codegen_flags: <defaults>
</compile_context>

<pallas_src>
import jax
import jax.numpy as jnp
from jax.experimental import pallas as pl
from jax.experimental.pallas import tpu as pltpu


def _func3_kernel(z1_ref, x_ref, o_ref, acc_ref):
    pid = pl.program_id(0)

    @pl.when(pid == 0)
    def _init():
        acc_ref[...] = jnp.zeros_like(acc_ref)

    # Quartic penalty on this tile: pure VALU work, no masking needed because
    # element 0 and all padding hold 1.0 -> (1-1)^4 = 0.
    d = x_ref[...] - 1.0                       # (block_rows, 128)
    q = d * d
    q4 = q * q
    # Fold into one vreg-sized accumulator: (block_rows,128) -> (N,8,128) is a
    # layout-preserving view (last two dims stay (8,128)), sum over axis 0 is
    # plain vector adds across vregs on the VPU.
    acc_ref[...] += jnp.sum(q4.reshape(-1, 8, 128), axis=0)

    @pl.when(pid == pl.num_programs(0) - 1)
    def _finalize():
        z1 = z1_ref[...]                       # (1, 1)
        term1 = jnp.tanh(0.5 * z1)             # == (e^z1 - 1)/(e^z1 + 1), overflow-safe
        term2 = 0.1 * jnp.exp(-z1)             # == 0.1 / exp(z1)
        o_ref[...] = term1 + term2 + jnp.sum(acc_ref[...])


def func3(x, *, max_block_rows=1024):
    """x: 1-D array of shape (n,), n >= 1. Returns scalar f32."""
    x = jnp.asarray(x, jnp.float32)
    n = x.shape[0]

    # z1 feeds the two scalar terms, computed once in the finalize step.
    z1 = x[0].reshape(1, 1)

    # Quartic slab: overwrite element 0 with 1.0 (contributes 0 to the sum);
    # padding also uses 1.0 so no in-kernel masking is required.
    xq = x.at[0].set(1.0)

    lane_rows = (n + 127) // 128                       # rows of 128 lanes
    rows = ((lane_rows + 7) // 8) * 8                  # sublane-align to 8
    block_rows = min(max_block_rows, rows)             # multiple of 8
    total_rows = ((rows + block_rows - 1) // block_rows) * block_rows
    padded = total_rows * 128
    if padded > n:
        xq = jnp.pad(xq, (0, padded - n), constant_values=1.0)
    xq = xq.reshape(total_rows, 128)

    num_blocks = total_rows // block_rows

    grid_spec = pltpu.PrefetchScalarGridSpec(
        num_scalar_prefetch=0,
        grid=(num_blocks,),
        in_specs=[
            pl.BlockSpec((1, 1), lambda i: (0, 0)),              # z1
            pl.BlockSpec((block_rows, 128), lambda i: (i, 0)),   # quartic slab
        ],
        out_specs=pl.BlockSpec((1, 1), lambda i: (0, 0)),
        scratch_shapes=[pltpu.VMEM((8, 128), jnp.float32)],
    )

    out = pl.pallas_call(
        _func3_kernel,
        out_shape=jax.ShapeDtypeStruct((1, 1), jnp.float32),
        grid_spec=grid_spec,
        compiler_params=pltpu.CompilerParams(
            dimension_semantics=("arbitrary",)),
    )(z1, xq)
    return out[0, 0]


def _func3_ref(x):
    x = jnp.asarray(x, jnp.float32)
    z1 = x[0]
    e = jnp.exp(z1)
    return (e - 1.0) / (e + 1.0) + 0.1 / e + jnp.sum((x[1:] - 1.0) ** 4)


if __name__ == "__main__":
    key = jax.random.PRNGKey(0)
    n = 8
    x = jax.random.normal(key, (n,), dtype=jnp.float32)

    f_kernel = jax.block_until_ready(func3(x))
    f_ref = jax.block_until_ready(_func3_ref(x))
    assert jnp.allclose(f_kernel, f_ref, rtol=1e-5, atol=1e-5), (f_kernel, f_ref)

    # Also exercise the multi-block path (n large enough for >1 grid step).
    x_big = jax.random.normal(jax.random.PRNGKey(1), (300_000,), dtype=jnp.float32)
    f_kernel_big = jax.block_until_ready(func3(x_big, max_block_rows=1024))
    f_ref_big = jax.block_until_ready(_func3_ref(x_big))
    assert jnp.allclose(f_kernel_big, f_ref_big, rtol=1e-4, atol=1e-4), (
        f_kernel_big, f_ref_big)

    print("KERNEL_OK")
</pallas_src>

<mosaic_0001>
module attributes {stable_mosaic.version = 11 : i64} {
  func.func @_func3_kernel(%arg0: i32, %arg1: memref<1x1xf32, #tpu.memory_space<vmem>>, %arg2: memref<8x128xf32, #tpu.memory_space<vmem>>, %arg3: memref<1x1xf32, #tpu.memory_space<vmem>>, %arg4: memref<8x128xf32, #tpu.memory_space<vmem>>) attributes {dimension_semantics = [#tpu.dimension_semantics<arbitrary>], iteration_bounds = array<i64: 1>, scalar_prefetch = 0 : i64, scratch_operands = 1 : i64, tpu.core_type = #tpu.core_type<tc>, window_params = [{pipeline_mode = #tpu.pipeline_mode<synchronous>, transform_indices = @transform_0, window_bounds = array<i64: 1, 1>}, {transform_indices = @transform_1, window_bounds = array<i64: 8, 128>}, {pipeline_mode = #tpu.pipeline_mode<synchronous>, transform_indices = @transform_2, window_bounds = array<i64: 1, 1>}]} {
    %c0_i32 = arith.constant 0 : i32
    %0 = arith.cmpi eq, %arg0, %c0_i32 : i32
    %1 = arith.extui %0 : i1 to i32
    %c0_i32_0 = arith.constant 0 : i32
    %2 = arith.cmpi ne, %1, %c0_i32_0 : i32
    scf.if %2 {
      %cst_9 = arith.constant 0.000000e+00 : f32
      %16 = vector.broadcast %cst_9 : f32 to vector<8x128xf32>
      %c0_10 = arith.constant 0 : index
      %c0_11 = arith.constant 0 : index
      %17 = vector.load %arg4[%c0_10, %c0_11] : memref<8x128xf32, #tpu.memory_space<vmem>>, vector<8x128xf32>
      tpu.vector_store %arg4[%c0_10, %c0_11], %16 {strides = array<i32>} : memref<8x128xf32, #tpu.memory_space<vmem>>, vector<8x128xf32>,
    } else {
    }
    %c0 = arith.constant 0 : index
    %c0_1 = arith.constant 0 : index
    %3 = vector.load %arg2[%c0, %c0_1] : memref<8x128xf32, #tpu.memory_space<vmem>>, vector<8x128xf32>
    %cst = arith.constant 1.000000e+00 : f32
    %4 = vector.broadcast %cst : f32 to vector<8x128xf32>
    %5 = arith.subf %3, %4 : vector<8x128xf32>
    %6 = arith.mulf %5, %5 : vector<8x128xf32>
    %7 = arith.mulf %6, %6 : vector<8x128xf32>
    %c0_2 = arith.constant 0 : index
    %c0_3 = arith.constant 0 : index
    %8 = vector.load %arg4[%c0_2, %c0_3] : memref<8x128xf32, #tpu.memory_space<vmem>>, vector<8x128xf32>
    %9 = vector.shape_cast %7 : vector<8x128xf32> to vector<1x8x128xf32>
    %cst_4 = arith.constant dense<0.000000e+00> : vector<8x128xf32>
    %10 = vector.multi_reduction <add>, %9, %cst_4 [0] : vector<1x8x128xf32> to vector<8x128xf32>
    %11 = arith.addf %8, %10 : vector<8x128xf32>
    %c0_5 = arith.constant 0 : index
    %c0_6 = arith.constant 0 : index
    %12 = vector.load %arg4[%c0_5, %c0_6] : memref<8x128xf32, #tpu.memory_space<vmem>>, vector<8x128xf32>
    tpu.vector_store %arg4[%c0_5, %c0_6], %11 {strides = array<i32>} : memref<8x128xf32, #tpu.memory_space<vmem>>, vector<8x128xf32>,
    %c0_i32_7 = arith.constant 0 : i32
    %13 = arith.cmpi eq, %arg0, %c0_i32_7 : i32
    %14 = arith.extui %13 : i1 to i32
    %c0_i32_8 = arith.constant 0 : i32
    %15 = arith.cmpi ne, %14, %c0_i32_8 : i32
    scf.if %15 {
      %c0_9 = arith.constant 0 : index
      %c0_10 = arith.constant 0 : index
      %16 = vector.load %arg1[%c0_9, %c0_10] : memref<1x1xf32, #tpu.memory_space<vmem>>, vector<1x1xf32>
      %cst_11 = arith.constant 5.000000e-01 : f32
      %17 = vector.broadcast %cst_11 : f32 to vector<1x1xf32>
      %18 = arith.mulf %17, %16 : vector<1x1xf32>
      %19 = math.tanh %18 : vector<1x1xf32>
      %cst_12 = arith.constant 0.000000e+00 : f32
      %20 = vector.broadcast %cst_12 : f32 to vector<1x1xf32>
      %21 = arith.subf %20, %16 : vector<1x1xf32>
      %22 = math.exp %21 : vector<1x1xf32>
      %cst_13 = arith.constant 1.000000e-01 : f32
      %23 = vector.broadcast %cst_13 : f32 to vector<1x1xf32>
      %24 = arith.mulf %23, %22 : vector<1x1xf32>
      %25 = arith.addf %19, %24 : vector<1x1xf32>
      %c0_14 = arith.constant 0 : index
      %c0_15 = arith.constant 0 : index
      %26 = vector.load %arg4[%c0_14, %c0_15] : memref<8x128xf32, #tpu.memory_space<vmem>>, vector<8x128xf32>
      %27 = vector.shape_cast %26 : vector<8x128xf32> to vector<1x8x128xf32>
      %cst_16 = arith.constant dense<0.000000e+00> : vector<1xf32>
      %28 = vector.multi_reduction <add>, %27, %cst_16 [1, 2] : vector<1x8x128xf32> to vector<1xf32>
      %29 = vector.shape_cast %28 : vector<1xf32> to vector<1x1x1xf32>
      %30 = vector.extract %29[0, 0, 0] : f32 from vector<1x1x1xf32>
      %31 = vector.broadcast %30 : f32 to vector<1x1xf32>
      %32 = arith.addf %25, %31 : vector<1x1xf32>
      %c0_17 = arith.constant 0 : index
      %c0_18 = arith.constant 0 : index
      %33 = vector.load %arg3[%c0_17, %c0_18] : memref<1x1xf32, #tpu.memory_space<vmem>>, vector<1x1xf32>
      tpu.vector_store %arg3[%c0_17, %c0_18], %32 {strides = array<i32>} : memref<1x1xf32, #tpu.memory_space<vmem>>, vector<1x1xf32>,
    } else {
    }
    return
  }
  func.func @transform_0(%arg0: i32) -> (i32, i32) {
    %c0_i32 = arith.constant 0 : i32
    %c0_i32_0 = arith.constant 0 : i32
    %c0_i32_1 = arith.constant 0 : i32
    return %c0_i32, %c0_i32_0 : i32, i32
  }
  func.func @transform_1(%arg0: i32) -> (i32, i32) {
    %c0_i32 = arith.constant 0 : i32
    %c0_i32_0 = arith.constant 0 : i32
    return %arg0, %c0_i32 : i32, i32
  }
  func.func @transform_2(%arg0: i32) -> (i32, i32) {
    %c0_i32 = arith.constant 0 : i32
    %c0_i32_0 = arith.constant 0 : i32
    %c0_i32_1 = arith.constant 0 : i32
    return %c0_i32, %c0_i32_0 : i32, i32
  }
}

</mosaic_0001>

<llo_original>
// kernel: tpu_custom_call.1
$region0: #{tpu_custom_call.1}
  #allocation0 [shape = 'u32[]', space=smem, size = 0x4, offset = 0x4, fixed_abs, tag = 'smem constant byte address 0x4 - core index']
  #allocation1 [shape = 'u32[72,128]{1,0:T(1,128)}', space=vmem, size = 0x9000, scoped, tag = 'internal scratch']
  #allocation2 [shape = 'f32[8,128]{1,0:T(8,128)}', space=vmem, size = 0x1000, scoped, tag = 'scratch operand']
  #allocation3 [shape = 'f32[1,1]{1,0:T(1,128)S(1)}', space=vmem, size = 0x200, scoped, tag = 'scoped memory for tpu_custom_call.1']
  %s0 = inlined_call_operand.<no memory space> [shape: f32[1,1], index: 0, kind: input, shape index: {}]
  %s1 = inlined_call_operand.hbm [shape: f32[8,128], index: 1, kind: input, shape index: {}]
  %s2 = inlined_call_operand.hbm [shape: f32[1,1], index: 2, kind: output, shape index: {}]
  %s3 = sld [smem:[#allocation0]]
  $region30: #{tpu_custom_call.1} parent=0
    _
  %s5 = ssub.s32 1, %s3
  %s6 = scalar_select 0, %s5, %s3
  %v7 = vstv %s0
  %8 = vst [vmem:[#allocation3] sm:$0x1] %v7
  $region1: #{tpu_custom_call.1} parent=0
    #allocation4 [shape = 'u8[4096]{0}', space=vmem, size = 0x1000, scoped, tag = 'input window, operand 1, single buffered']
    #allocation5 [shape = 's32[1]{0}', space=sflag, size = 0x4, scoped, tag = 'scoped memory for tpu_custom_call.1']
    #allocation6 [shape = 's32[1]{0}', space=sflag, size = 0x4, scoped, tag = 'scoped memory for tpu_custom_call.1']
    #allocation7 [shape = 'u8[512]{0}', space=vmem, size = 0x400, scoped, tag = 'output window, operand 0, single buffered']
    %9 = vsyncpa [#allocation5], 0
    %10 = vsyncpa [#allocation6], 0
    // Predicated region
    $region2: #{tpu_custom_call.1} parent=1 // pred_check
      _
    $region3: #{tpu_custom_call.1} parent=1 // pred_check_branch
      %12 = sbr.rel (0) target = $region5
    $region4: #{tpu_custom_call.1} parent=1 // pred_region
      _
    $region5: #{tpu_custom_call.1} parent=1 // pred_fallthru
      _
    // Predicated region
    $region6: #{tpu_custom_call.1} parent=1 // pred_check
      _
    $region7: #{tpu_custom_call.1} parent=1 // pred_check_branch
      %14 = sbr.rel (0) target = $region9
    $region8: #{tpu_custom_call.1} parent=1 // pred_region
      %16 = vsyncadd [#allocation5], 0
      %s18 = sshll.u32 %s1, 4
      %s19 = int_to_ptr.hbm [resolvable:$true] %s18
      %s20 = sshll.u32 [#allocation4], 4
      %s21 = int_to_ptr.vmem [resolvable:$true] %s20
      %23 = dma.hbm_to_vmem [thread:$0]  %s19, 128, %s21, [#allocation5]
    $region9: #{tpu_custom_call.1} parent=1 // pred_fallthru
      _
    // Predicated region
    $region10: #{tpu_custom_call.1} parent=1 // pred_check
      _
    $region11: #{tpu_custom_call.1} parent=1 // pred_check_branch
      %25 = sbr.rel (0) target = $region13
    $region12: #{tpu_custom_call.1} parent=1 // pred_region
      %27 = dma.done [#allocation5], 128
    $region13: #{tpu_custom_call.1} parent=1 // pred_fallthru
      _
    %p28 = scmp.eq.s32.totalorder 0, 0
    // Predicated region
    $region14: #{tpu_custom_call.1} parent=1 // pred_check
      %p29 = pneg %p28
    $region15: #{tpu_custom_call.1} parent=1 // pred_check_branch
      %31 = sbr.rel (%p29) target = $region17
    $region16: #{tpu_custom_call.1} parent=1 // pred_region
      %32 = vst [vmem:[#allocation2] sm:$0xff] 0.0
    $region17: #{tpu_custom_call.1} parent=1 // pred_fallthru
      _
    %v33 = vld [vmem:[#allocation4] sm:$0xff]
    %v34 = vsub.f32 %v33, 1.0
    %v35 = vmul.f32 %v34, %v34
    %v36 = vmul.f32 %v35, %v35
    %v37 = vld [vmem:[#allocation2] sm:$0xff]
    %v38 = vadd.f32 %v36, 0.0
    %v39 = vadd.f32 %v37, %v38
    %40 = vst [vmem:[#allocation2] sm:$0xff] %v39
    // Predicated region
    $region18: #{tpu_custom_call.1} parent=1 // pred_check
      %p41 = pneg %p28
    $region19: #{tpu_custom_call.1} parent=1 // pred_check_branch
      %43 = sbr.rel (%p41) target = $region21
    $region20: #{tpu_custom_call.1} parent=1 // pred_region
      %v44 = vld [vmem:[#allocation3] sm:$0x1]
      %v45 = vmul.f32 %v44, 0.5
      %v46 = vtanh.pop %v45
      %v47 = vsub.f32 0.0, %v44
      %v48 = vmul.f32 %v47, 1.442695
      %v49 = vpow.pop %v48
      %v50 = vmul.f32 %v49, 0.1
      %v51 = vadd.f32 %v46, %v50
      %v52 = vld [vmem:[#allocation2] sm:$0xff]
      %53 = vadd.xlane.f32.xlu0 %v52
      %v54 = vpop.xlane.xlu0 %53
      %v55 = vrot.slane %v54, 4
      %v56 = vadd.f32 %v54, %v55
      %v57 = vrot.slane %v56, 2
      %v58 = vadd.f32 %v56, %v57
      %v59 = vrot.slane %v58, 1
      %v60 = vadd.f32 %v58, %v59
      %s61 = vtos %v60
      %v62 = vstv %s61
      %v63 = vadd.f32 %v51, %v62
      %vm64 = vcmask 0
      %65 = vst.msk [vmem:[#allocation7] sm:$0x1] %vm64, %v63
    $region21: #{tpu_custom_call.1} parent=1 // pred_fallthru
      _
    // Predicated region
    $region22: #{tpu_custom_call.1} parent=1 // pred_check
      _
    $region23: #{tpu_custom_call.1} parent=1 // pred_check_branch
      %67 = sbr.rel (0) target = $region25
    $region24: #{tpu_custom_call.1} parent=1 // pred_region
      %69 = vsyncadd [#allocation6], 0
      %s71 = sshll.u32 [#allocation7], 4
      %s72 = int_to_ptr.vmem [resolvable:$true] %s71
      %s73 = sshll.u32 %s2, 4
      %s74 = int_to_ptr.hbm [resolvable:$true] %s73
      %76 = dma.vmem_to_hbm [thread:$0]  %s72, 16, %s74, [#allocation6]
    $region25: #{tpu_custom_call.1} parent=1 // pred_fallthru
      _
    // Predicated region
    $region26: #{tpu_custom_call.1} parent=1 // pred_check
      _
    $region27: #{tpu_custom_call.1} parent=1 // pred_check_branch
      %78 = sbr.rel (0) target = $region29
    $region28: #{tpu_custom_call.1} parent=1 // pred_region
      %80 = dma.done [#allocation6], 16
    $region29: #{tpu_custom_call.1} parent=1 // pred_fallthru
      _
    %81 = vsyncpa [#allocation5], 1
    %82 = vsyncpa [#allocation6], 1

</llo_original>
